<compile_context>
chip_gen: v7x
topology: tpu7x:2x2x1
jax: 0.10.0
libtpu: 0.0.40
codegen_flags: <defaults>
</compile_context>

<pallas_src>
import numpy as np
import jax
import jax.numpy as jnp
from jax import lax
from jax.experimental import pallas as pl
from jax.experimental.pallas import tpu as pltpu


def _make_upsample_conv_kernel(Cin, Cout, W, HW, P0, Gp):
    """Kernel body (closure over static geometry)."""
    taps = [(dy, dx) for dy in range(3) for dx in range(3)]
    slide_winsize = 9.0  # 3x3, multi_channel=False

    def kernel(x_ref, m_ref, w_ref, b_ref, cm_ref, a_ref, out_ref, base_ref, p_ref):
        # x_ref  : (1, Cin, HW)     image, spatial flattened row-major (unpadded)
        # m_ref  : (1, 1,  HW)      mask, same flat layout
        # w_ref  : (Cout+1, 9*Gp)   extended conv weight (row Cout = ones on mask taps)
        # b_ref  : (Cout, 1)        conv bias (lane-broadcast column)
        # cm_ref : (2, HW)          column-edge masks (row 0 kills x==0, row 1 kills x==W-1)
        # a_ref  : (1,)             PReLU slope, SMEM scalar
        # out_ref: (1, Cout+1, HW)  rows 0..Cout-1 = PReLU(partial conv), row Cout = updc
        # base_ref: (Gp, Lp)        zero-padded flat scratch (x*mask rows + mask row)
        # p_ref  : (9*Gp, HW)       im2col scratch (one Gp-row group per tap)

        m = m_ref[0]                                             # (1, HW)
        base_ref[...] = jnp.zeros_like(base_ref)                 # top/bottom zero pad + guards
        base_ref[pl.ds(0, Cin), pl.ds(P0, HW)] = x_ref[0] * m    # fused x*mask
        base_ref[pl.ds(Cin, 1), pl.ds(P0, HW)] = m               # mask channel

        left_ok = cm_ref[pl.ds(0, 1), :]                         # (1, HW)
        right_ok = cm_ref[pl.ds(1, 1), :]

        # Fill im2col scratch: 9 statically shifted copies of the base rows
        # (aligned full-group stores; lane rotations consolidated in this phase).
        for t, (dy, dx) in enumerate(taps):
            s = P0 - W - 1 + dy * W + dx                         # static flat shift
            blk = base_ref[:, pl.ds(s, HW)]                      # (Gp, HW)
            if dx == 0:
                blk = blk * left_ok                              # restore left zero pad
            elif dx == 2:
                blk = blk * right_ok                             # restore right zero pad
            p_ref[pl.ds(t * Gp, Gp), :] = blk

        # One MXU push: rows 0..Cout-1 = raw conv (no bias), row Cout = mask box-sum.
        acc = jnp.dot(w_ref[...], p_ref[...], preferred_element_type=jnp.float32)
        raw = acc[:Cout]                                         # (Cout, HW)
        upd = acc[Cout:Cout + 1]                                 # (1, HW)

        # PartialConv2d renormalization; reciprocal on the (otherwise idle) EUP.
        ratio = slide_winsize * pl.reciprocal(upd + 1e-8, approx=True)
        updc = jnp.clip(upd, 0.0, 1.0)
        ratio = ratio * updc
        out = (raw * ratio + b_ref[...]) * updc

        # PReLU (scalar slope commutes with the pixel shuffle -> exact PyTorch ordering).
        a = a_ref[0]
        out = jnp.where(out >= 0, out, a * out)

        out_ref[0] = jnp.concatenate([out, updc], axis=0).astype(out_ref.dtype)

    return kernel


def upsample_block_forward(x, mask, weight, bias, prelu_a, up_scale):
    """x: (N, Cin, H, W), mask: (N, 1, H, W) -> (y, mask_up) in NCHW, like PyTorch."""
    N, Cin, H, W = x.shape
    Cout = weight.shape[0]
    HW = H * W                                   # flat output length (128-aligned at 16x16)
    Gp = ((Cin + 1 + 7) // 8) * 8                # x channels + mask channel, padded to 8 rows
    K = 9 * Gp                                   # MXU contraction depth
    P0 = 2 * W                                   # flat offset of pixel (0,0) in the base scratch
    Lp = ((HW + P0 + W + 1 + 127) // 128) * 128  # padded flat length (keeps all shifts in-bounds)

    # ---- glue (bitcast-only): flatten spatial, no jnp.pad / no im2col in HBM ----
    x2 = x.reshape(N, Cin, HW)
    m2 = mask.reshape(N, 1, HW)

    # Extended weight: per tap, a (Cout+1, Gp) block; last row sums the mask taps.
    w_taps = jnp.transpose(weight, (2, 3, 0, 1)).reshape(9, Cout, Cin)
    wb = jnp.zeros((9, Cout + 1, Gp), weight.dtype)
    wb = wb.at[:, :Cout, :Cin].set(w_taps)
    wb = wb.at[:, Cout, Cin].set(1.0)
    w_ext = jnp.transpose(wb, (1, 0, 2)).reshape(Cout + 1, K)
    b2 = bias.reshape(Cout, 1)
    a2 = jnp.reshape(prelu_a, (1,)).astype(jnp.float32)

    # Static column-edge masks (kill wrap-around reads of the left/right zero pad).
    col = np.arange(HW) % W
    cmask = jnp.asarray(np.stack([(col != 0), (col != W - 1)]).astype(np.float32))

    ce = pl.CostEstimate(
        flops=int(2 * (Cout + 1) * K * HW * N),
        transcendentals=int(N * HW),
        bytes_accessed=int(4 * (x2.size + m2.size + w_ext.size + b2.size
                                + cmask.size + N * (Cout + 1) * HW)))

    slab = pl.pallas_call(
        _make_upsample_conv_kernel(Cin, Cout, W, HW, P0, Gp),
        out_shape=jax.ShapeDtypeStruct((N, Cout + 1, HW), x.dtype),
        grid_spec=pltpu.PrefetchScalarGridSpec(
            num_scalar_prefetch=0,
            grid=(N,),
            in_specs=[pl.BlockSpec((1, Cin, HW), lambda n: (n, 0, 0)),
                      pl.BlockSpec((1, 1, HW), lambda n: (n, 0, 0)),
                      pl.BlockSpec((Cout + 1, K), lambda n: (0, 0)),
                      pl.BlockSpec((Cout, 1), lambda n: (0, 0)),
                      pl.BlockSpec((2, HW), lambda n: (0, 0)),
                      pl.BlockSpec(memory_space=pltpu.MemorySpace.SMEM)],
            out_specs=pl.BlockSpec((1, Cout + 1, HW), lambda n: (n, 0, 0)),
            scratch_shapes=[pltpu.VMEM((Gp, Lp), jnp.float32),
                            pltpu.VMEM((K, HW), jnp.float32)]),
        compiler_params=pltpu.CompilerParams(
            dimension_semantics=("parallel",),
            vmem_limit_bytes=4 * 1024 * 1024),
        cost_estimate=ce,
    )(x2, m2, w_ext, b2, cmask, a2)

    # ---- glue: split slab, pixel shuffle, nearest-neighbor mask upsample ----
    r = up_scale
    C = Cout // (r * r)
    y = slab[:, :Cout, :].reshape(N, C, r, r, H, W)
    y = y.transpose(0, 1, 4, 2, 5, 3).reshape(N, C, H * r, W * r)
    m = slab[:, Cout:, :].reshape(N, 1, H, W)
    m = jnp.repeat(jnp.repeat(m, r, axis=2), r, axis=3)
    return y, m


def reference_forward(x, mask, weight, bias, prelu_a, up_scale):
    """Pure-JAX reference with exact PyTorch op ordering (for verification)."""
    xm = x * mask
    raw = lax.conv_general_dilated(
        xm, weight, (1, 1), ((1, 1), (1, 1)),
        dimension_numbers=('NCHW', 'OIHW', 'NCHW'),
        precision=lax.Precision.HIGHEST)
    upd = lax.conv_general_dilated(
        mask, jnp.ones((1, 1, 3, 3), x.dtype), (1, 1), ((1, 1), (1, 1)),
        dimension_numbers=('NCHW', 'OIHW', 'NCHW'),
        precision=lax.Precision.HIGHEST)
    ratio = 9.0 / (upd + 1e-8)
    updc = jnp.clip(upd, 0.0, 1.0)
    ratio = ratio * updc
    b = bias.reshape(1, -1, 1, 1)
    out = (raw * ratio + b) * updc
    # pixel shuffle
    N, Cr2, H, W = out.shape
    r = up_scale
    C = Cr2 // (r * r)
    out = out.reshape(N, C, r, r, H, W).transpose(0, 1, 4, 2, 5, 3)
    out = out.reshape(N, C, H * r, W * r)
    # PReLU (after pixel shuffle, as in PyTorch)
    out = jnp.where(out >= 0, out, prelu_a * out)
    # nearest-neighbor mask upsample
    m = jnp.repeat(jnp.repeat(updc, r, axis=2), r, axis=3)
    return out, m


if __name__ == "__main__":
    key = jax.random.PRNGKey(0)
    N, Cin, H, W = 2, 4, 16, 16
    up_scale = 2
    Cout = Cin * up_scale ** 2

    k1, k2, k3, k4 = jax.random.split(key, 4)
    x = jax.random.normal(k1, (N, Cin, H, W), jnp.float32)
    mask = (jax.random.uniform(k2, (N, 1, H, W)) > 0.3).astype(jnp.float32)

    # deterministic synthetic parameters (shapes from the module's __init__)
    fan_in = Cin * 3 * 3
    weight = jax.random.normal(k3, (Cout, Cin, 3, 3), jnp.float32) / jnp.sqrt(fan_in)
    bias = jax.random.normal(k4, (Cout,), jnp.float32) * 0.1
    prelu_a = jnp.float32(0.25)   # nn.PReLU() default init

    fwd = jax.jit(lambda xx, mm, ww, bb, aa:
                  upsample_block_forward(xx, mm, ww, bb, aa, up_scale=up_scale))
    y, m = fwd(x, mask, weight, bias, prelu_a)
    jax.block_until_ready((y, m))

    y_ref, m_ref = reference_forward(x, mask, weight, bias, prelu_a, up_scale)
    assert y.shape == (N, Cin, H * up_scale, W * up_scale)
    assert m.shape == (N, 1, H * up_scale, W * up_scale)
    np.testing.assert_allclose(np.asarray(y), np.asarray(y_ref), rtol=1e-3, atol=1e-3)
    np.testing.assert_allclose(np.asarray(m), np.asarray(m_ref), rtol=0, atol=1e-6)

    print("KERNEL_OK")
</pallas_src>

<mosaic_0001>
module attributes {stable_mosaic.version = 11 : i64} {
  func.func @kernel(%arg0: i32, %arg1: memref<1x4x256xf32, #tpu.memory_space<vmem>>, %arg2: memref<1x1x256xf32, #tpu.memory_space<vmem>>, %arg3: memref<17x72xf32, #tpu.memory_space<vmem>>, %arg4: memref<16x1xf32, #tpu.memory_space<vmem>>, %arg5: memref<2x256xf32, #tpu.memory_space<vmem>>, %arg6: memref<1xf32, #tpu.memory_space<smem>>, %arg7: memref<1x17x256xf32, #tpu.memory_space<vmem>>, %arg8: memref<8x384xf32, #tpu.memory_space<vmem>>, %arg9: memref<72x256xf32, #tpu.memory_space<vmem>>) attributes {dimension_semantics = [#tpu.dimension_semantics<parallel>], iteration_bounds = array<i64: 2>, scalar_prefetch = 0 : i64, scratch_operands = 2 : i64, tpu.core_type = #tpu.core_type<tc>, window_params = [{transform_indices = @transform_0, window_bounds = array<i64: 1, 4, 256>}, {transform_indices = @transform_1, window_bounds = array<i64: 1, 1, 256>}, {pipeline_mode = #tpu.pipeline_mode<synchronous>, transform_indices = @transform_2, window_bounds = array<i64: 17, 72>}, {pipeline_mode = #tpu.pipeline_mode<synchronous>, transform_indices = @transform_3, window_bounds = array<i64: 16, 1>}, {pipeline_mode = #tpu.pipeline_mode<synchronous>, transform_indices = @transform_4, window_bounds = array<i64: 2, 256>}, {transform_indices = @transform_5, window_bounds = array<i64: 1>}, {transform_indices = @transform_6, window_bounds = array<i64: 1, 17, 256>}]} {
    %c0 = arith.constant 0 : index
    %c0_0 = arith.constant 0 : index
    %c0_1 = arith.constant 0 : index
    %0 = vector.load %arg2[%c0, %c0_0, %c0_1] : memref<1x1x256xf32, #tpu.memory_space<vmem>>, vector<1x1x256xf32>
    %1 = vector.shape_cast %0 : vector<1x1x256xf32> to vector<1x256xf32>
    %cst = arith.constant 0.000000e+00 : f32
    %2 = vector.broadcast %cst : f32 to vector<8x384xf32>
    %c0_2 = arith.constant 0 : index
    %c0_3 = arith.constant 0 : index
    %3 = vector.load %arg8[%c0_2, %c0_3] : memref<8x384xf32, #tpu.memory_space<vmem>>, vector<8x384xf32>
    tpu.vector_store %arg8[%c0_2, %c0_3], %2 {strides = array<i32>} : memref<8x384xf32, #tpu.memory_space<vmem>>, vector<8x384xf32>,
    %c0_4 = arith.constant 0 : index
    %c0_5 = arith.constant 0 : index
    %c0_6 = arith.constant 0 : index
    %4 = vector.load %arg1[%c0_4, %c0_5, %c0_6] : memref<1x4x256xf32, #tpu.memory_space<vmem>>, vector<1x4x256xf32>
    %5 = vector.shape_cast %4 : vector<1x4x256xf32> to vector<4x256xf32>
    %6 = vector.broadcast %1 : vector<1x256xf32> to vector<4x256xf32>
    %7 = arith.mulf %5, %6 : vector<4x256xf32>
    %c0_7 = arith.constant 0 : index
    %c32 = arith.constant 32 : index
    %8 = vector.load %arg8[%c0_7, %c32] : memref<8x384xf32, #tpu.memory_space<vmem>>, vector<4x256xf32>
    tpu.vector_store %arg8[%c0_7, %c32], %7 {strides = array<i32>} : memref<8x384xf32, #tpu.memory_space<vmem>>, vector<4x256xf32>,
    %c4 = arith.constant 4 : index
    %c32_8 = arith.constant 32 : index
    %9 = vector.load %arg8[%c4, %c32_8] : memref<8x384xf32, #tpu.memory_space<vmem>>, vector<1x256xf32>
    tpu.vector_store %arg8[%c4, %c32_8], %1 {strides = array<i32>} : memref<8x384xf32, #tpu.memory_space<vmem>>, vector<1x256xf32>,
    %c0_9 = arith.constant 0 : index
    %c0_10 = arith.constant 0 : index
    %10 = vector.load %arg5[%c0_9, %c0_10] : memref<2x256xf32, #tpu.memory_space<vmem>>, vector<1x256xf32>
    %c1 = arith.constant 1 : index
    %c0_11 = arith.constant 0 : index
    %11 = vector.load %arg5[%c1, %c0_11] : memref<2x256xf32, #tpu.memory_space<vmem>>, vector<1x256xf32>
    %c0_12 = arith.constant 0 : index
    %c15 = arith.constant 15 : index
    %12 = vector.load %arg8[%c0_12, %c15] : memref<8x384xf32, #tpu.memory_space<vmem>>, vector<8x256xf32>
    %13 = vector.broadcast %10 : vector<1x256xf32> to vector<8x256xf32>
    %14 = arith.mulf %12, %13 : vector<8x256xf32>
    %c0_13 = arith.constant 0 : index
    %c0_14 = arith.constant 0 : index
    %15 = vector.load %arg9[%c0_13, %c0_14] : memref<72x256xf32, #tpu.memory_space<vmem>>, vector<8x256xf32>
    tpu.vector_store %arg9[%c0_13, %c0_14], %14 {strides = array<i32>} : memref<72x256xf32, #tpu.memory_space<vmem>>, vector<8x256xf32>,
    %c0_15 = arith.constant 0 : index
    %c16 = arith.constant 16 : index
    %16 = vector.load %arg8[%c0_15, %c16] : memref<8x384xf32, #tpu.memory_space<vmem>>, vector<8x256xf32>
    %c8 = arith.constant 8 : index
    %c0_16 = arith.constant 0 : index
    %17 = vector.load %arg9[%c8, %c0_16] : memref<72x256xf32, #tpu.memory_space<vmem>>, vector<8x256xf32>
    tpu.vector_store %arg9[%c8, %c0_16], %16 {strides = array<i32>} : memref<72x256xf32, #tpu.memory_space<vmem>>, vector<8x256xf32>,
    %c0_17 = arith.constant 0 : index
    %c17 = arith.constant 17 : index
    %18 = vector.load %arg8[%c0_17, %c17] : memref<8x384xf32, #tpu.memory_space<vmem>>, vector<8x256xf32>
    %19 = vector.broadcast %11 : vector<1x256xf32> to vector<8x256xf32>
    %20 = arith.mulf %18, %19 : vector<8x256xf32>
    %c16_18 = arith.constant 16 : index
    %c0_19 = arith.constant 0 : index
    %21 = vector.load %arg9[%c16_18, %c0_19] : memref<72x256xf32, #tpu.memory_space<vmem>>, vector<8x256xf32>
    tpu.vector_store %arg9[%c16_18, %c0_19], %20 {strides = array<i32>} : memref<72x256xf32, #tpu.memory_space<vmem>>, vector<8x256xf32>,
    %c0_20 = arith.constant 0 : index
    %c31 = arith.constant 31 : index
    %22 = vector.load %arg8[%c0_20, %c31] : memref<8x384xf32, #tpu.memory_space<vmem>>, vector<8x256xf32>
    %23 = vector.broadcast %10 : vector<1x256xf32> to vector<8x256xf32>
    %24 = arith.mulf %22, %23 : vector<8x256xf32>
    %c24 = arith.constant 24 : index
    %c0_21 = arith.constant 0 : index
    %25 = vector.load %arg9[%c24, %c0_21] : memref<72x256xf32, #tpu.memory_space<vmem>>, vector<8x256xf32>
    tpu.vector_store %arg9[%c24, %c0_21], %24 {strides = array<i32>} : memref<72x256xf32, #tpu.memory_space<vmem>>, vector<8x256xf32>,
    %c0_22 = arith.constant 0 : index
    %c32_23 = arith.constant 32 : index
    %26 = vector.load %arg8[%c0_22, %c32_23] : memref<8x384xf32, #tpu.memory_space<vmem>>, vector<8x256xf32>
    %c32_24 = arith.constant 32 : index
    %c0_25 = arith.constant 0 : index
    %27 = vector.load %arg9[%c32_24, %c0_25] : memref<72x256xf32, #tpu.memory_space<vmem>>, vector<8x256xf32>
    tpu.vector_store %arg9[%c32_24, %c0_25], %26 {strides = array<i32>} : memref<72x256xf32, #tpu.memory_space<vmem>>, vector<8x256xf32>,
    %c0_26 = arith.constant 0 : index
    %c33 = arith.constant 33 : index
    %28 = vector.load %arg8[%c0_26, %c33] : memref<8x384xf32, #tpu.memory_space<vmem>>, vector<8x256xf32>
    %29 = vector.broadcast %11 : vector<1x256xf32> to vector<8x256xf32>
    %30 = arith.mulf %28, %29 : vector<8x256xf32>
    %c40 = arith.constant 40 : index
    %c0_27 = arith.constant 0 : index
    %31 = vector.load %arg9[%c40, %c0_27] : memref<72x256xf32, #tpu.memory_space<vmem>>, vector<8x256xf32>
    tpu.vector_store %arg9[%c40, %c0_27], %30 {strides = array<i32>} : memref<72x256xf32, #tpu.memory_space<vmem>>, vector<8x256xf32>,
    %c0_28 = arith.constant 0 : index
    %c47 = arith.constant 47 : index
    %32 = vector.load %arg8[%c0_28, %c47] : memref<8x384xf32, #tpu.memory_space<vmem>>, vector<8x256xf32>
    %33 = vector.broadcast %10 : vector<1x256xf32> to vector<8x256xf32>
    %34 = arith.mulf %32, %33 : vector<8x256xf32>
    %c48 = arith.constant 48 : index
    %c0_29 = arith.constant 0 : index
    %35 = vector.load %arg9[%c48, %c0_29] : memref<72x256xf32, #tpu.memory_space<vmem>>, vector<8x256xf32>
    tpu.vector_store %arg9[%c48, %c0_29], %34 {strides = array<i32>} : memref<72x256xf32, #tpu.memory_space<vmem>>, vector<8x256xf32>,
    %c0_30 = arith.constant 0 : index
    %c48_31 = arith.constant 48 : index
    %36 = vector.load %arg8[%c0_30, %c48_31] : memref<8x384xf32, #tpu.memory_space<vmem>>, vector<8x256xf32>
    %c56 = arith.constant 56 : index
    %c0_32 = arith.constant 0 : index
    %37 = vector.load %arg9[%c56, %c0_32] : memref<72x256xf32, #tpu.memory_space<vmem>>, vector<8x256xf32>
    tpu.vector_store %arg9[%c56, %c0_32], %36 {strides = array<i32>} : memref<72x256xf32, #tpu.memory_space<vmem>>, vector<8x256xf32>,
    %c0_33 = arith.constant 0 : index
    %c49 = arith.constant 49 : index
    %38 = vector.load %arg8[%c0_33, %c49] : memref<8x384xf32, #tpu.memory_space<vmem>>, vector<8x256xf32>
    %39 = vector.broadcast %11 : vector<1x256xf32> to vector<8x256xf32>
    %40 = arith.mulf %38, %39 : vector<8x256xf32>
    %c64 = arith.constant 64 : index
    %c0_34 = arith.constant 0 : index
    %41 = vector.load %arg9[%c64, %c0_34] : memref<72x256xf32, #tpu.memory_space<vmem>>, vector<8x256xf32>
    tpu.vector_store %arg9[%c64, %c0_34], %40 {strides = array<i32>} : memref<72x256xf32, #tpu.memory_space<vmem>>, vector<8x256xf32>,
    %c0_35 = arith.constant 0 : index
    %c0_36 = arith.constant 0 : index
    %42 = vector.load %arg3[%c0_35, %c0_36] : memref<17x72xf32, #tpu.memory_space<vmem>>, vector<17x72xf32>
    %c0_37 = arith.constant 0 : index
    %c0_38 = arith.constant 0 : index
    %43 = vector.load %arg9[%c0_37, %c0_38] : memref<72x256xf32, #tpu.memory_space<vmem>>, vector<72x256xf32>
    %cst_39 = arith.constant dense<0.000000e+00> : vector<17x256xf32>
    %44 = tpu.matmul %42, %43, %cst_39 {dimension_numbers = #tpu.dot_dimension_numbers<[1], [0], [0], [1], [0, 0, 1, 1], [], []>} : vector<17x72xf32>, vector<72x256xf32>, vector<17x256xf32> -> vector<17x256xf32>
    %45 = vector.extract_strided_slice %44 {offsets = [0, 0], sizes = [16, 256], strides = [1, 1]} : vector<17x256xf32> to vector<16x256xf32>
    %46 = vector.extract_strided_slice %44 {offsets = [16, 0], sizes = [1, 256], strides = [1, 1]} : vector<17x256xf32> to vector<1x256xf32>
    %cst_40 = arith.constant 9.99999993E-9 : f32
    %47 = vector.broadcast %cst_40 : f32 to vector<1x256xf32>
    %48 = arith.addf %46, %47 : vector<1x256xf32>
    %49 = tpu.reciprocal %48 {approx = true} : vector<1x256xf32> -> vector<1x256xf32>
    %cst_41 = arith.constant 9.000000e+00 : f32
    %50 = vector.broadcast %cst_41 : f32 to vector<1x256xf32>
    %51 = arith.mulf %50, %49 : vector<1x256xf32>
    %cst_42 = arith.constant 0.000000e+00 : f32
    %cst_43 = arith.constant 1.000000e+00 : f32
    %52 = vector.broadcast %cst_42 : f32 to vector<1x256xf32>
    %53 = arith.maximumf %52, %46 : vector<1x256xf32>
    %54 = vector.broadcast %cst_43 : f32 to vector<1x256xf32>
    %55 = arith.minimumf %54, %53 : vector<1x256xf32>
    %56 = arith.mulf %51, %55 : vector<1x256xf32>
    %57 = vector.broadcast %56 : vector<1x256xf32> to vector<16x256xf32>
    %58 = arith.mulf %45, %57 : vector<16x256xf32>
    %c0_44 = arith.constant 0 : index
    %c0_45 = arith.constant 0 : index
    %59 = vector.load %arg4[%c0_44, %c0_45] : memref<16x1xf32, #tpu.memory_space<vmem>>, vector<16x1xf32>
    %60 = vector.broadcast %59 : vector<16x1xf32> to vector<16x256xf32>
    %61 = arith.addf %58, %60 : vector<16x256xf32>
    %62 = vector.broadcast %55 : vector<1x256xf32> to vector<16x256xf32>
    %63 = arith.mulf %61, %62 : vector<16x256xf32>
    %c0_46 = arith.constant 0 : index
    %64 = memref.load %arg6[%c0_46] : memref<1xf32, #tpu.memory_space<smem>>
    %cst_47 = arith.constant 0.000000e+00 : f32
    %65 = vector.broadcast %cst_47 : f32 to vector<16x256xf32>
    %66 = arith.cmpf oge, %63, %65 : vector<16x256xf32>
    %67 = vector.broadcast %64 : f32 to vector<16x256xf32>
    %68 = arith.mulf %67, %63 : vector<16x256xf32>
    %69 = arith.select %66, %63, %68 : vector<16x256xi1>, vector<16x256xf32>
    %70 = tpu.concatenate %69, %55 in 0 : vector<16x256xf32>, vector<1x256xf32> -> vector<17x256xf32>
    %c0_48 = arith.constant 0 : index
    %c0_49 = arith.constant 0 : index
    %c0_50 = arith.constant 0 : index
    %71 = vector.load %arg7[%c0_48, %c0_49, %c0_50] : memref<1x17x256xf32, #tpu.memory_space<vmem>>, vector<1x17x256xf32>
    %72 = vector.shape_cast %71 : vector<1x17x256xf32> to vector<17x256xf32>
    %73 = vector.shape_cast %70 : vector<17x256xf32> to vector<1x17x256xf32>
    tpu.vector_store %arg7[%c0_48, %c0_49, %c0_50], %73 {strides = array<i32>} : memref<1x17x256xf32, #tpu.memory_space<vmem>>, vector<1x17x256xf32>,
    return
  }
  func.func @transform_0(%arg0: i32) -> (i32, i32, i32) {
    %c0_i32 = arith.constant 0 : i32
    %c0_i32_0 = arith.constant 0 : i32
    %c0_i32_1 = arith.constant 0 : i32
    return %arg0, %c0_i32, %c0_i32_0 : i32, i32, i32
  }
  func.func @transform_1(%arg0: i32) -> (i32, i32, i32) {
    %c0_i32 = arith.constant 0 : i32
    %c0_i32_0 = arith.constant 0 : i32
    %c0_i32_1 = arith.constant 0 : i32
    return %arg0, %c0_i32, %c0_i32_0 : i32, i32, i32
  }
  func.func @transform_2(%arg0: i32) -> (i32, i32) {
    %c0_i32 = arith.constant 0 : i32
    %c0_i32_0 = arith.constant 0 : i32
    %c0_i32_1 = arith.constant 0 : i32
    return %c0_i32, %c0_i32_0 : i32, i32
  }
  func.func @transform_3(%arg0: i32) -> (i32, i32) {
    %c0_i32 = arith.constant 0 : i32
    %c0_i32_0 = arith.constant 0 : i32
    %c0_i32_1 = arith.constant 0 : i32
    return %c0_i32, %c0_i32_0 : i32, i32
  }
  func.func @transform_4(%arg0: i32) -> (i32, i32) {
    %c0_i32 = arith.constant 0 : i32
    %c0_i32_0 = arith.constant 0 : i32
    %c0_i32_1 = arith.constant 0 : i32
    return %c0_i32, %c0_i32_0 : i32, i32
  }
  func.func @transform_5(%arg0: i32) -> i32 {
    %c0_i32 = arith.constant 0 : i32
    %c0_i32_0 = arith.constant 0 : i32
    return %c0_i32 : i32
  }
  func.func @transform_6(%arg0: i32) -> (i32, i32, i32) {
    %c0_i32 = arith.constant 0 : i32
    %c0_i32_0 = arith.constant 0 : i32
    %c0_i32_1 = arith.constant 0 : i32
    return %arg0, %c0_i32, %c0_i32_0 : i32, i32, i32
  }
}

</mosaic_0001>

<llo_original>
// kernel: _lambda_.1
$region0: #{_lambda_.1}
  #allocation0 [shape = 'u32[]', space=smem, size = 0x4, offset = 0x4, fixed_abs, tag = 'smem constant byte address 0x4 - core index']
  #allocation1 [shape = 'u32[144,128]{1,0:T(1,128)}', space=vmem, size = 0x12000, scoped, tag = 'internal scratch']
  #allocation2 [shape = 'f32[8,384]{1,0:T(8,128)}', space=vmem, size = 0x3000, scoped, tag = 'scratch operand']
  #allocation3 [shape = 'f32[72,256]{1,0:T(8,128)}', space=vmem, size = 0x12000, scoped, tag = 'scratch operand']
  #allocation4 [shape = 'f32[1]{0:T(128)S(6)}', space=smem, size = 0x200, scoped, tag = 'scoped memory for _lambda_.1']
  %s0 = inlined_call_operand.vmem [shape: f32[2,4,256], index: 0, kind: input, shape index: {}]
  %s1 = inlined_call_operand.vmem [shape: f32[2,1,256], index: 1, kind: input, shape index: {}]
  %s2 = inlined_call_operand.vmem [shape: f32[17,72], index: 2, kind: input, shape index: {}]
  %s3 = inlined_call_operand.vmem [shape: f32[16,1], index: 3, kind: input, shape index: {}]
  %s4 = inlined_call_operand.vmem [shape: f32[2,256], index: 4, kind: input, shape index: {}]
  %s5 = inlined_call_operand.<no memory space> [shape: f32[1], index: 5, kind: input, shape index: {}]
  %s6 = inlined_call_operand.vmem [shape: f32[2,17,256], index: 6, kind: output, shape index: {}]
  %s7 = sld [smem:[#allocation0]]
  $region57: #{_lambda_.1} parent=0
    _
  %s9 = ssub.s32 1, %s7
  %s10 = scalar_select 0, %s9, %s7
  %11 = sst [smem:[#allocation4]] %s5
  loop: start=0, step=1, limit=4
  $region2: #{_lambda_.1} parent=0 // loop_pre_header
    _
  $region3: #{_lambda_.1} parent=0 // loop_header
    %s13 = sphi 0, %s17
    %p14 = scmp.ge.s32.totalorder %s13, 4
    %s23 = sphi 0, %s25
    %s26 = sphi 0, %s23
    %s27 = sphi 0, %s26
    %s43 = sphi 0, %s27
    %s49 = sphi 0, %s51
    %s52 = sphi 0, %s49
    %s53 = sphi 0, %s52
    %s69 = sphi 0, %s53
    %s73 = sphi 0, %s73
    %s75 = sphi 0, %s73
    %s76 = sphi 0, %s75
    %s90 = sphi 0, %s76
    %s94 = sphi 0, %s94
    %s96 = sphi 0, %s94
    %s97 = sphi 0, %s96
    %s111 = sphi 0, %s97
    %s115 = sphi 0, %s115
    %s117 = sphi 0, %s115
    %s118 = sphi 0, %s117
    %s132 = sphi 0, %s118
    %s136 = sphi 0, %s136
    %s138 = sphi 0, %s136
    %s139 = sphi 0, %s138
    %s153 = sphi 0, %s139
    %s159 = sphi 0, %s161
    %s162 = sphi 0, %s159
    %s163 = sphi 0, %s162
    %s179 = sphi 0, %s163
  $region4: #{_lambda_.1} parent=0 // loop_header_branch
    %16 = sbr.rel (%p14) target = $region8
  $region5: #{_lambda_.1} parent=0 // loop_body
    %s18 = ssub.s32 %s13, 1
    %s19 = ssub.s32 %s13, 2
    %s20 = sadd.s32 %s13, 1
    %s21 = ssub.s32 %s13, %s20
    %p22 = scmp.eq.s32.totalorder %s21, 0
    %s24 = sadd.s32 %s23, 1
    %s25 = scalar_select %p22, %s23, %s24
    %p28 = pneg %p22
    %p29 = scmp.eq.s32.totalorder %s13, 1
    %p30 = por %p28, %p29
    %p31 = scmp.ne.s32.totalorder %s23, %s26
    %p32 = scmp.eq.s32.totalorder %s13, 0
    %p33 = por %p31, %p32
    %p34 = scmp.ne.s32.totalorder %s23, %s26
    %p35 = scmp.eq.s32.totalorder %s18, 1
    %p36 = por %p34, %p35
    %p37 = scmp.ne.s32.totalorder %s26, %s27
    %p38 = scmp.eq.s32.totalorder %s18, 0
    %p39 = por %p37, %p38
    %p40 = scmp.ne.s32.totalorder %s26, %s27
    %p41 = scmp.eq.s32.totalorder %s19, 1
    %p42 = por %p40, %p41
    %p44 = scmp.ne.s32.totalorder %s27, %s43
    %p45 = scmp.eq.s32.totalorder %s19, 0
    %p46 = por %p44, %p45
    %s47 = ssub.s32 %s13, %s20
    %p48 = scmp.eq.s32.totalorder %s47, 0
    %s50 = sadd.s32 %s49, 1
    %s51 = scalar_select %p48, %s49, %s50
    %p54 = pneg %p48
    %p55 = scmp.eq.s32.totalorder %s13, 1
    %p56 = por %p54, %p55
    %p57 = scmp.ne.s32.totalorder %s49, %s52
    %p58 = scmp.eq.s32.totalorder %s13, 0
    %p59 = por %p57, %p58
    %p60 = scmp.ne.s32.totalorder %s49, %s52
    %p61 = scmp.eq.s32.totalorder %s18, 1
    %p62 = por %p60, %p61
    %p63 = scmp.ne.s32.totalorder %s52, %s53
    %p64 = scmp.eq.s32.totalorder %s18, 0
    %p65 = por %p63, %p64
    %p66 = scmp.ne.s32.totalorder %s52, %s53
    %p67 = scmp.eq.s32.totalorder %s19, 1
    %p68 = por %p66, %p67
    %p70 = scmp.ne.s32.totalorder %s53, %s69
    %p71 = scmp.eq.s32.totalorder %s19, 0
    %p72 = por %p70, %p71
    %s74 = sadd.s32 %s73, 1
    %p77 = scmp.eq.s32.totalorder %s13, 1
    %p78 = scmp.ne.s32.totalorder %s73, %s75
    %p79 = scmp.eq.s32.totalorder %s13, 0
    %p80 = por %p78, %p79
    %p81 = scmp.ne.s32.totalorder %s73, %s75
    %p82 = scmp.eq.s32.totalorder %s18, 1
    %p83 = por %p81, %p82
    %p84 = scmp.ne.s32.totalorder %s75, %s76
    %p85 = scmp.eq.s32.totalorder %s18, 0
    %p86 = por %p84, %p85
    %p87 = scmp.ne.s32.totalorder %s75, %s76
    %p88 = scmp.eq.s32.totalorder %s19, 1
    %p89 = por %p87, %p88
    %p91 = scmp.ne.s32.totalorder %s76, %s90
    %p92 = scmp.eq.s32.totalorder %s19, 0
    %p93 = por %p91, %p92
    %s95 = sadd.s32 %s94, 1
    %p98 = scmp.eq.s32.totalorder %s13, 1
    %p99 = scmp.ne.s32.totalorder %s94, %s96
    %p100 = scmp.eq.s32.totalorder %s13, 0
    %p101 = por %p99, %p100
    %p102 = scmp.ne.s32.totalorder %s94, %s96
    %p103 = scmp.eq.s32.totalorder %s18, 1
    %p104 = por %p102, %p103
    %p105 = scmp.ne.s32.totalorder %s96, %s97
    %p106 = scmp.eq.s32.totalorder %s18, 0
    %p107 = por %p105, %p106
    %p108 = scmp.ne.s32.totalorder %s96, %s97
    %p109 = scmp.eq.s32.totalorder %s19, 1
    %p110 = por %p108, %p109
    %p112 = scmp.ne.s32.totalorder %s97, %s111
    %p113 = scmp.eq.s32.totalorder %s19, 0
    %p114 = por %p112, %p113
    %s116 = sadd.s32 %s115, 1
    %p119 = scmp.eq.s32.totalorder %s13, 1
    %p120 = scmp.ne.s32.totalorder %s115, %s117
    %p121 = scmp.eq.s32.totalorder %s13, 0
    %p122 = por %p120, %p121
    %p123 = scmp.ne.s32.totalorder %s115, %s117
    %p124 = scmp.eq.s32.totalorder %s18, 1
    %p125 = por %p123, %p124
    %p126 = scmp.ne.s32.totalorder %s117, %s118
    %p127 = scmp.eq.s32.totalorder %s18, 0
    %p128 = por %p126, %p127
    %p129 = scmp.ne.s32.totalorder %s117, %s118
    %p130 = scmp.eq.s32.totalorder %s19, 1
    %p131 = por %p129, %p130
    %p133 = scmp.ne.s32.totalorder %s118, %s132
    %p134 = scmp.eq.s32.totalorder %s19, 0
    %p135 = por %p133, %p134
    %s137 = sadd.s32 %s136, 1
    %p140 = scmp.eq.s32.totalorder %s13, 1
    %p141 = scmp.ne.s32.totalorder %s136, %s138
    %p142 = scmp.eq.s32.totalorder %s13, 0
    %p143 = por %p141, %p142
    %p144 = scmp.ne.s32.totalorder %s136, %s138
    %p145 = scmp.eq.s32.totalorder %s18, 1
    %p146 = por %p144, %p145
    %p147 = scmp.ne.s32.totalorder %s138, %s139
    %p148 = scmp.eq.s32.totalorder %s18, 0
    %p149 = por %p147, %p148
    %p150 = scmp.ne.s32.totalorder %s138, %s139
    %p151 = scmp.eq.s32.totalorder %s19, 1
    %p152 = por %p150, %p151
    %p154 = scmp.ne.s32.totalorder %s139, %s153
    %p155 = scmp.eq.s32.totalorder %s19, 0
    %p156 = por %p154, %p155
    %s157 = ssub.s32 %s13, %s20
    %p158 = scmp.eq.s32.totalorder %s157, 0
    %s160 = sadd.s32 %s159, 1
    %s161 = scalar_select %p158, %s159, %s160
    %p164 = pneg %p158
    %p165 = scmp.eq.s32.totalorder %s13, 1
    %p166 = por %p164, %p165
    %p167 = scmp.ne.s32.totalorder %s159, %s162
    %p168 = scmp.eq.s32.totalorder %s13, 0
    %p169 = por %p167, %p168
    %p170 = scmp.ne.s32.totalorder %s159, %s162
    %p171 = scmp.eq.s32.totalorder %s18, 1
    %p172 = por %p170, %p171
    %p173 = scmp.ne.s32.totalorder %s162, %s163
    %p174 = scmp.eq.s32.totalorder %s18, 0
    %p175 = por %p173, %p174
    %p176 = scmp.ne.s32.totalorder %s162, %s163
    %p177 = scmp.eq.s32.totalorder %s19, 1
    %p178 = por %p176, %p177
    %p180 = scmp.ne.s32.totalorder %s163, %s179
    %p181 = scmp.eq.s32.totalorder %s19, 0
    %p182 = por %p180, %p181
    %p183 = scmp.le.s32.totalorder 1, %s13
    %p184 = scmp.lt.s32.totalorder %s13, 3
    %p185 = pnand %p183, %p184
    %p186 = pneg %p185
    // Predicated region
    $region9: #{_lambda_.1} parent=5 // pred_check
      _
    $region10: #{_lambda_.1} parent=5 // pred_check_branch
      %188 = sbr.rel (%p185) target = $region12
    $region11: #{_lambda_.1} parent=5 // pred_region
      %s189 = ssub.s32 %s13, 1
      // Predicated region
      $region13: #{_lambda_.1} parent=11 // pred_check
        %p190 = pneg %p86
      $region14: #{_lambda_.1} parent=11 // pred_check_branch
        %192 = sbr.rel (%p190) target = $region16
      $region15: #{_lambda_.1} parent=11 // pred_region
        _
      $region16: #{_lambda_.1} parent=11 // pred_fallthru
        _
      // Predicated region
      $region17: #{_lambda_.1} parent=11 // pred_check
        %p193 = pneg %p107
      $region18: #{_lambda_.1} parent=11 // pred_check_branch
        %195 = sbr.rel (%p193) target = $region20
      $region19: #{_lambda_.1} parent=11 // pred_region
        _
      $region20: #{_lambda_.1} parent=11 // pred_fallthru
        _
      // Predicated region
      $region21: #{_lambda_.1} parent=11 // pred_check
        %p196 = pneg %p128
      $region22: #{_lambda_.1} parent=11 // pred_check_branch
        %198 = sbr.rel (%p196) target = $region24
      $region23: #{_lambda_.1} parent=11 // pred_region
        _
      $region24: #{_lambda_.1} parent=11 // pred_fallthru
        _
      // Predicated region
      $region25: #{_lambda_.1} parent=11 // pred_check
        %p199 = pneg %p149
      $region26: #{_lambda_.1} parent=11 // pred_check_branch
        %201 = sbr.rel (%p199) target = $region28
      $region27: #{_lambda_.1} parent=11 // pred_region
        _
      $region28: #{_lambda_.1} parent=11 // pred_fallthru
        _
    $region12: #{_lambda_.1} parent=5 // pred_fallthru
      _
    %p202 = scmp.lt.s32.totalorder %s13, 2
    // Predicated region
    $region29: #{_lambda_.1} parent=5 // pred_check
      %p203 = pneg %p202
    $region30: #{_lambda_.1} parent=5 // pred_check_branch
      %205 = sbr.rel (%p203) target = $region32
    $region31: #{_lambda_.1} parent=5 // pred_region
      // Predicated region
      $region33: #{_lambda_.1} parent=31 // pred_check
        %p206 = pneg %p33
      $region34: #{_lambda_.1} parent=31 // pred_check_branch
        %208 = sbr.rel (%p206) target = $region36
      $region35: #{_lambda_.1} parent=31 // pred_region
        %p209 = scmp.lt.s32.totalorder %s13, 1
        %s210 = scalar_select %p209, %s13, 1
        %s211 = smul.addr %s210, 2
        %s212 = smul.addr %s211, 4
        %s213 = scalar_lea.vmem %s0, %s212
      $region36: #{_lambda_.1} parent=31 // pred_fallthru
        _
      // Predicated region
      $region37: #{_lambda_.1} parent=31 // pred_check
        %p214 = pneg %p59
      $region38: #{_lambda_.1} parent=31 // pred_check_branch
        %216 = sbr.rel (%p214) target = $region40
      $region39: #{_lambda_.1} parent=31 // pred_region
        %p217 = scmp.lt.s32.totalorder %s13, 1
        %s218 = scalar_select %p217, %s13, 1
        %s219 = smul.addr %s218, 2
        %s220 = scalar_lea.vmem %s1, %s219
      $region40: #{_lambda_.1} parent=31 // pred_fallthru
        _
    $region32: #{_lambda_.1} parent=5 // pred_fallthru
      _
    %p221 = scmp.le.s32.totalorder 1, %s13
    %p222 = scmp.lt.s32.totalorder %s13, 3
    %p223 = pnand %p221, %p222
    %p224 = pneg %p223
    // Predicated region
    $region41: #{_lambda_.1} parent=5 // pred_check
      _
    $region42: #{_lambda_.1} parent=5 // pred_check_branch
      %226 = sbr.rel (%p223) target = $region44
    $region43: #{_lambda_.1} parent=5 // pred_region
      %s227 = ssub.s32 %s13, 1
      %p228 = scmp.lt.s32.totalorder %s18, 1
      %s229 = scalar_select %p228, %s18, 1
      %s230 = smul.addr %s229, 2
      %s231 = smul.addr %s230, 4
      %s232 = scalar_lea.vmem %s0, %s231
      %p233 = pneg %p39
      %p234 = pneg %p36
      %p235 = scmp.lt.s32.totalorder %s18, 1
      %s236 = scalar_select %p235, %s18, 1
      %s237 = smul.addr %s236, 2
      %s238 = scalar_lea.vmem %s1, %s237
      %p239 = pneg %p65
      %p240 = pneg %p62
      %p241 = pneg %p86
      %p242 = pneg %p83
      %p243 = pneg %p107
      %p244 = pneg %p104
      %p245 = pneg %p128
      %p246 = pneg %p125
      %p247 = pneg %p149
      %p248 = pneg %p146
      %p249 = pneg %p175
      %p250 = pneg %p172
      %p251 = scmp.lt.s32.totalorder %s18, 1
      %s252 = scalar_select %p251, %s18, 1
      %s253 = smul.addr %s252, 6
      %s254 = smul.addr %s253, 8
      %s255 = scalar_lea.vmem %s6, %s254
      %p256 = scmp.lt.s32.totalorder %s18, 1
      %s257 = scalar_select %p256, %s18, 1
      %s258 = smul.addr %s257, 2
      %s259 = smul.addr %s258, 4
      %s260 = scalar_lea.vmem %s0, %s259
      %p261 = scmp.lt.s32.totalorder %s18, 1
      %s262 = scalar_select %p261, %s18, 1
      %s263 = smul.addr %s262, 2
      %s264 = scalar_lea.vmem %s1, %s263
      %p265 = scmp.lt.s32.totalorder %s18, 1
      %s266 = scalar_select %p265, %s18, 1
      %s267 = smul.addr %s266, 6
      %s268 = smul.addr %s267, 8
      %s269 = scalar_lea.vmem %s6, %s268
      %v270 = vld [vmem:[%s264] sm:$0x3]
      %271 = vst [vmem:[#allocation2] sm:$0xff] 0.0
      %272 = vst [vmem:[#allocation2 + $0x8] sm:$0xff] 0.0
      %273 = vst [vmem:[#allocation2 + $0x10] sm:$0xff] 0.0
      %v274 = vld [vmem:[%s260] sm:$0xff]
      %v276 = vlaneseq
      %v277 = vshrl.u32 %v276, 7
      %v278 = vsub.s32 0, %v277
      %v279 = vrot.slane %v270, %v278
      %v280 = vlaneseq
      %v281 = vshrl.u32 %v280, 7
      %v282 = vsub.s32 1, %v281
      %v283 = vrot.slane %v270, %v282
      %v284 = vcombine.low %v279, %v283
      %v286 = vmul.f32 %v274, %v284
      %v288 = vcombine.high %v286, %v286
      %289 = vrot.lane.b32.xlu0 %v286, 32
      %v290 = vpop.permute.xlu0 %289
      %291 = vrot.lane.b32.xlu0 %v288, 32
      %v292 = vpop.permute.xlu0 %291
      %vm293 = vcmask 261120
      %v294 = vsel %vm293, %v290, %v292
      %vm298 = vcmask 1043712
      %299 = vst.msk [vmem:[#allocation2] sm:$0xf] %vm298, %v290
      %300 = vst [vmem:[#allocation2 + $0x8] sm:$0xf] %v294
      %vm301 = vcmask 257024
      %302 = vst.msk [vmem:[#allocation2 + $0x10] sm:$0xf] %vm301, %v292
      %303 = vrot.lane.b32.xlu0 %v270, 32
      %v304 = vpop.permute.xlu0 %303
      %v305 = vrot.slane %v304, 7
      %v306 = vsel %vm293, %v305, %v304
      %v308 = vlaneseq
      %vm309 = vcmp.ge.s32.totalorder %v308, 32
      %vm310 = vcmp.lt.s32.totalorder %v308, 288
      %vm311 = vmand %vm309, %vm310
      %s312 = scalar_lea.vmem [#allocation2], 4
      %313 = vst.msk [vmem:[%s312] ss:$8 sm:$0x7] %vm311, %v306
      %314 = vst.msk [vmem:[%s312] ss:$8 sm:$0x0] %vm311, %v306
      %v315 = vld [vmem:[%s4] ss:$2 sm:$0x3]
      %s316 = scalar_lea.vmem %s4, 1
      %v317 = vld [vmem:[%s316] ss:$2 sm:$0x3]
      %v318 = vld [vmem:[#allocation2] sm:$0xff]
      %v319 = vld [vmem:[#allocation2 + $0x8] sm:$0xff]
      %v320 = vld [vmem:[#allocation2 + $0x10] sm:$0xff]
      %v322 = vlaneseq
      %v323 = vshrl.u32 %v322, 7
      %v324 = vsub.s32 0, %v323
      %v325 = vrot.slane %v315, %v324
      %v326 = vlaneseq
      %v327 = vshrl.u32 %v326, 7
      %v328 = vsub.s32 1, %v327
      %v329 = vrot.slane %v315, %v328
      %330 = vrot.lane.b32.xlu0 %v325, 15
      %v331 = vpop.permute.xlu0 %330
      %332 = vrot.lane.b32.xlu0 %v329, 15
      %v333 = vpop.permute.xlu0 %332
      %vm334 = vcmask 121856
      %v335 = vsel %vm334, %v331, %v333
      %v339 = vmul.f32 %v318, %v331
      %v340 = vmul.f32 %v319, %v335
      %v341 = vmul.f32 %v320, %v333
      %345 = vrot.lane.b32.xlu0 %v339, 113
      %v346 = vpop.permute.xlu0 %345
      %347 = vrot.lane.b32.xlu0 %v340, 113
      %v348 = vpop.permute.xlu0 %347
      %349 = vrot.lane.b32.xlu0 %v341, 113
      %v350 = vpop.permute.xlu0 %349
      %vm351 = vcmask 924672
      %v352 = vsel %vm351, %v346, %v348
      %v353 = vsel %vm351, %v348, %v350
      %356 = vst [vmem:[#allocation3] sm:$0xff] %v352
      %357 = vst [vmem:[#allocation3 + $0x8] sm:$0xff] %v353
      %v358 = vld [vmem:[#allocation2] sm:$0xff]
      %v359 = vld [vmem:[#allocation2 + $0x8] sm:$0xff]
      %v360 = vld [vmem:[#allocation2 + $0x10] sm:$0xff]
      %364 = vrot.lane.b32.xlu0 %v358, 112
      %v365 = vpop.permute.xlu0 %364
      %366 = vrot.lane.b32.xlu0 %v359, 112
      %v367 = vpop.permute.xlu0 %366
      %368 = vrot.lane.b32.xlu0 %v360, 112
      %v369 = vpop.permute.xlu0 %368
      %vm370 = vcmask 916480
      %v371 = vsel %vm370, %v365, %v367
      %v372 = vsel %vm370, %v367, %v369
      %375 = vst [vmem:[#allocation3 + $0x10] sm:$0xff] %v371
      %376 = vst [vmem:[#allocation3 + $0x18] sm:$0xff] %v372
      %v377 = vld [vmem:[#allocation2] sm:$0xff]
      %v378 = vld [vmem:[#allocation2 + $0x8] sm:$0xff]
      %v379 = vld [vmem:[#allocation2 + $0x10] sm:$0xff]
      %v381 = vlaneseq
      %v382 = vshrl.u32 %v381, 7
      %v383 = vsub.s32 0, %v382
      %v384 = vrot.slane %v317, %v383
      %v385 = vlaneseq
      %v386 = vshrl.u32 %v385, 7
      %v387 = vsub.s32 1, %v386
      %v388 = vrot.slane %v317, %v387
      %389 = vrot.lane.b32.xlu0 %v384, 17
      %v390 = vpop.permute.xlu0 %389
      %391 = vrot.lane.b32.xlu0 %v388, 17
      %v392 = vpop.permute.xlu0 %391
      %vm393 = vcmask 138240
      %v394 = vsel %vm393, %v390, %v392
      %v398 = vmul.f32 %v377, %v390
      %v399 = vmul.f32 %v378, %v394
      %v400 = vmul.f32 %v379, %v392
      %404 = vrot.lane.b32.xlu0 %v398, 111
      %v405 = vpop.permute.xlu0 %404
      %406 = vrot.lane.b32.xlu0 %v399, 111
      %v407 = vpop.permute.xlu0 %406
      %408 = vrot.lane.b32.xlu0 %v400, 111
      %v409 = vpop.permute.xlu0 %408
      %vm410 = vcmask 908288
      %v411 = vsel %vm410, %v405, %v407
      %v412 = vsel %vm410, %v407, %v409
      %415 = vst [vmem:[#allocation3 + $0x20] sm:$0xff] %v411
      %416 = vst [vmem:[#allocation3 + $0x28] sm:$0xff] %v412
      %v417 = vld [vmem:[#allocation2] sm:$0xff]
      %v418 = vld [vmem:[#allocation2 + $0x8] sm:$0xff]
      %v419 = vld [vmem:[#allocation2 + $0x10] sm:$0xff]
      %420 = vrot.lane.b32.xlu0 %v325, 31
      %v421 = vpop.permute.xlu0 %420
      %422 = vrot.lane.b32.xlu0 %v329, 31
      %v423 = vpop.permute.xlu0 %422
      %vm424 = vcmask 252928
      %v425 = vsel %vm424, %v421, %v423
      %v429 = vmul.f32 %v417, %v421
      %v430 = vmul.f32 %v418, %v425
      %v431 = vmul.f32 %v419, %v423
      %435 = vrot.lane.b32.xlu0 %v429, 97
      %v436 = vpop.permute.xlu0 %435
      %437 = vrot.lane.b32.xlu0 %v430, 97
      %v438 = vpop.permute.xlu0 %437
      %439 = vrot.lane.b32.xlu0 %v431, 97
      %v440 = vpop.permute.xlu0 %439
      %vm441 = vcmask 793600
      %v442 = vsel %vm441, %v436, %v438
      %v443 = vsel %vm441, %v438, %v440
      %446 = vst [vmem:[#allocation3 + $0x30] sm:$0xff] %v442
      %447 = vst [vmem:[#allocation3 + $0x38] sm:$0xff] %v443
      %v448 = vld [vmem:[#allocation2] sm:$0xff]
      %v449 = vld [vmem:[#allocation2 + $0x8] sm:$0xff]
      %v450 = vld [vmem:[#allocation2 + $0x10] sm:$0xff]
      %454 = vrot.lane.b32.xlu0 %v448, 96
      %v455 = vpop.permute.xlu0 %454
      %456 = vrot.lane.b32.xlu0 %v449, 96
      %v457 = vpop.permute.xlu0 %456
      %458 = vrot.lane.b32.xlu0 %v450, 96
      %v459 = vpop.permute.xlu0 %458
      %vm460 = vcmask 785408
      %v461 = vsel %vm460, %v455, %v457
      %v462 = vsel %vm460, %v457, %v459
      %465 = vst [vmem:[#allocation3 + $0x40] sm:$0xff] %v461
      %466 = vst [vmem:[#allocation3 + $0x48] sm:$0xff] %v462
      %v467 = vld [vmem:[#allocation2] sm:$0xff]
      %v468 = vld [vmem:[#allocation2 + $0x8] sm:$0xff]
      %v469 = vld [vmem:[#allocation2 + $0x10] sm:$0xff]
      %470 = vrot.lane.b32.xlu0 %v384, 33
      %v471 = vpop.permute.xlu0 %470
      %472 = vrot.lane.b32.xlu0 %v388, 33
      %v473 = vpop.permute.xlu0 %472
      %vm474 = vcmask 269312
      %v475 = vsel %vm474, %v471, %v473
      %v479 = vmul.f32 %v467, %v471
      %v480 = vmul.f32 %v468, %v475
      %v481 = vmul.f32 %v469, %v473
      %485 = vrot.lane.b32.xlu0 %v479, 95
      %v486 = vpop.permute.xlu0 %485
      %487 = vrot.lane.b32.xlu0 %v480, 95
      %v488 = vpop.permute.xlu0 %487
      %489 = vrot.lane.b32.xlu0 %v481, 95
      %v490 = vpop.permute.xlu0 %489
      %vm491 = vcmask 777216
      %v492 = vsel %vm491, %v486, %v488
      %v493 = vsel %vm491, %v488, %v490
      %496 = vst [vmem:[#allocation3 + $0x50] sm:$0xff] %v492
      %497 = vst [vmem:[#allocation3 + $0x58] sm:$0xff] %v493
      %v498 = vld [vmem:[#allocation2] sm:$0xff]
      %v499 = vld [vmem:[#allocation2 + $0x8] sm:$0xff]
      %v500 = vld [vmem:[#allocation2 + $0x10] sm:$0xff]
      %501 = vrot.lane.b32.xlu0 %v325, 47
      %v502 = vpop.permute.xlu0 %501
      %503 = vrot.lane.b32.xlu0 %v329, 47
      %v504 = vpop.permute.xlu0 %503
      %vm505 = vcmask 384000
      %v506 = vsel %vm505, %v502, %v504
      %v510 = vmul.f32 %v498, %v502
      %v511 = vmul.f32 %v499, %v506
      %v512 = vmul.f32 %v500, %v504
      %516 = vrot.lane.b32.xlu0 %v510, 81
      %v517 = vpop.permute.xlu0 %516
      %518 = vrot.lane.b32.xlu0 %v511, 81
      %v519 = vpop.permute.xlu0 %518
      %520 = vrot.lane.b32.xlu0 %v512, 81
      %v521 = vpop.permute.xlu0 %520
      %vm522 = vcmask 662528
      %v523 = vsel %vm522, %v517, %v519
      %v524 = vsel %vm522, %v519, %v521
      %527 = vst [vmem:[#allocation3 + $0x60] sm:$0xff] %v523
      %528 = vst [vmem:[#allocation3 + $0x68] sm:$0xff] %v524
      %v529 = vld [vmem:[#allocation2] sm:$0xff]
      %v530 = vld [vmem:[#allocation2 + $0x8] sm:$0xff]
      %v531 = vld [vmem:[#allocation2 + $0x10] sm:$0xff]
      %535 = vrot.lane.b32.xlu0 %v529, 80
      %v536 = vpop.permute.xlu0 %535
      %537 = vrot.lane.b32.xlu0 %v530, 80
      %v538 = vpop.permute.xlu0 %537
      %539 = vrot.lane.b32.xlu0 %v531, 80
      %v540 = vpop.permute.xlu0 %539
      %vm541 = vcmask 654336
      %v542 = vsel %vm541, %v536, %v538
      %v543 = vsel %vm541, %v538, %v540
      %546 = vst [vmem:[#allocation3 + $0x70] sm:$0xff] %v542
      %547 = vst [vmem:[#allocation3 + $0x78] sm:$0xff] %v543
      %v548 = vld [vmem:[#allocation2] sm:$0xff]
      %v549 = vld [vmem:[#allocation2 + $0x8] sm:$0xff]
      %v550 = vld [vmem:[#allocation2 + $0x10] sm:$0xff]
      %551 = vrot.lane.b32.xlu0 %v384, 49
      %v552 = vpop.permute.xlu0 %551
      %553 = vrot.lane.b32.xlu0 %v388, 49
      %v554 = vpop.permute.xlu0 %553
      %vm555 = vcmask 400384
      %v556 = vsel %vm555, %v552, %v554
      %v560 = vmul.f32 %v548, %v552
      %v561 = vmul.f32 %v549, %v556
      %v562 = vmul.f32 %v550, %v554
      %566 = vrot.lane.b32.xlu0 %v560, 79
      %v567 = vpop.permute.xlu0 %566
      %568 = vrot.lane.b32.xlu0 %v561, 79
      %v569 = vpop.permute.xlu0 %568
      %570 = vrot.lane.b32.xlu0 %v562, 79
      %v571 = vpop.permute.xlu0 %570
      %vm572 = vcmask 646144
      %v573 = vsel %vm572, %v567, %v569
      %v574 = vsel %vm572, %v569, %v571
      %577 = vst [vmem:[#allocation3 + $0x80] sm:$0xff] %v573
      %578 = vst [vmem:[#allocation3 + $0x88] sm:$0xff] %v574
      %v579 = vld [vmem:[%s2] sm:$0xff]
      %v580 = vld [vmem:[%s2 + $0x8] sm:$0xff]
      %v581 = vld [vmem:[%s2 + $0x10] sm:$0x1]
      %v582 = vld [vmem:[#allocation3] sm:$0xff]
      %v583 = vld [vmem:[#allocation3 + $0x8] sm:$0xff]
      %v584 = vld [vmem:[#allocation3 + $0x10] sm:$0xff]
      %v585 = vld [vmem:[#allocation3 + $0x18] sm:$0xff]
      %v586 = vld [vmem:[#allocation3 + $0x20] sm:$0xff]
      %v587 = vld [vmem:[#allocation3 + $0x28] sm:$0xff]
      %v588 = vld [vmem:[#allocation3 + $0x30] sm:$0xff]
      %v589 = vld [vmem:[#allocation3 + $0x38] sm:$0xff]
      %v590 = vld [vmem:[#allocation3 + $0x40] sm:$0xff]
      %v591 = vld [vmem:[#allocation3 + $0x48] sm:$0xff]
      %v592 = vld [vmem:[#allocation3 + $0x50] sm:$0xff]
      %v593 = vld [vmem:[#allocation3 + $0x58] sm:$0xff]
      %v594 = vld [vmem:[#allocation3 + $0x60] sm:$0xff]
      %v595 = vld [vmem:[#allocation3 + $0x68] sm:$0xff]
      %v596 = vld [vmem:[#allocation3 + $0x70] sm:$0xff]
      %v597 = vld [vmem:[#allocation3 + $0x78] sm:$0xff]
      %v598 = vld [vmem:[#allocation3 + $0x80] sm:$0xff]
      %v599 = vld [vmem:[#allocation3 + $0x88] sm:$0xff]
      %vm600 = vcmask 588800
      %v602 = vsel %vm600, %v579, 0
      %v605 = vsel %vm600, %v580, 0
      %v608 = vsel %vm600, %v581, 0
      %610 = vmatprep.subr.mxu0 %v583
      %611 = vmatpush1.msra.mxu0 %v582
      %612 = vmatprep.subr.mxu0 %v585
      %613 = vmatpush1.msra.mxu0 %v584
      %614 = vmatprep.subr.mxu0 %v587
      %615 = vmatpush1.msra.mxu0 %v586
      %616 = vmatprep.subr.mxu0 %v589
      %617 = vmatpush1.msra.mxu0 %v588
      %618 = vmatprep.subr.mxu0 %v591
      %619 = vmatpush1.msra.mxu0 %v590
      %620 = vmatprep.subr.mxu0 %v593
      %621 = vmatpush1.msra.mxu0 %v592
      %622 = vmatprep.subr.mxu0 %v595
      %623 = vmatpush1.msra.mxu0 %v594
      %624 = vmatprep.subr.mxu0 %v597
      %625 = vmatpush1.msra.mxu0 %v596
      %626 = vmatprep.subr.mxu0 %v599
      %627 = vmatpush1.msra.mxu0 %v598
      %628 = vmatprep.subr.mxu0 0.0
      %629 = vmatpush1.msra.mxu0 0.0
      %630 = vmatprep.subr.mxu0 0.0
      %631 = vmatpush1.msra.mxu0 0.0
      %632 = vmatprep.subr.mxu0 0.0
      %633 = vmatpush1.msra.mxu0 0.0
      %634 = vmatprep.subr.mxu0 0.0
      %635 = vmatpush1.msra.mxu0 0.0
      %636 = vmatprep.subr.mxu0 0.0
      %637 = vmatpush1.msra.mxu0 0.0
      %638 = vmatprep.subr.mxu0 0.0
      %639 = vmatpush1.msra.mxu0 0.0
      %640 = vmatprep.subr.mxu0 0.0
      %641 = vmatpush1.msra.mxu0 0.0
      %642 = vmatprep.subr.mxu0 0.0
      %643 = vmatpush1.msra.mxu0 0.0
      %644 = vmatprep.subr.mxu0 0.0
      %645 = vmatpush1.msra.mxu0 0.0
      %646 = vmatprep.subr.mxu0 0.0
      %647 = vmatpush1.msra.mxu0 0.0
      %648 = vmatprep.subr.mxu0 0.0
      %649 = vmatpush1.msra.mxu0 0.0
      %650 = vmatprep.subr.mxu0 0.0
      %651 = vmatpush1.msra.mxu0 0.0
      %652 = vmatprep.subr.mxu0 0.0
      %653 = vmatpush1.msra.mxu0 0.0
      %654 = vmatprep.subr.mxu0 0.0
      %655 = vmatpush1.msra.mxu0 0.0
      %656 = vmatprep.subr.mxu0 0.0
      %657 = vmatpush1.msra.mxu0 0.0
      %658 = vmatprep.subr.mxu0 0.0
      %659 = vmatpush1.msra.mxu0 0.0
      %660 = vmatprep.subr.mxu0 0.0
      %661 = vmatpush1.msra.mxu0 0.0
      %662 = vmatprep.subr.mxu0 0.0
      %663 = vmatpush1.msra.mxu0 0.0
      %664 = vmatprep.subr.mxu0 0.0
      %665 = vmatpush1.msra.mxu0 0.0
      %666 = vmatprep.subr.mxu0 0.0
      %667 = vmatpush1.msra.mxu0 0.0
      %668 = vmatprep.subr.mxu0 0.0
      %669 = vmatpush1.msra.mxu0 0.0
      %670 = vmatprep.subr.mxu0 0.0
      %671 = vmatpush1.msra.mxu0 0.0
      %672 = vmatprep.subr.mxu0 0.0
      %673 = vmatpush1.msra.mxu0 0.0
      %674 = vmatprep.mubr.f32.mxu0 0.0
      %675 = vmatmul.mubr.f32.gmra.mrb[0].mxu0 %v602
      %v676 = vpop.f32.mrb[0].mxu0
      %v677 = vadd.f32 0.0, %v676
      %v678 = vpop.f32.mrb[0].mxu0
      %v679 = vadd.f32 0.0, %v678
      %680 = vmatprep.mubr.f32.mxu0 0.0
      %681 = vmatmul.mubr.f32.gmra.mrb[0].mxu0 %v605
      %v682 = vpop.f32.mrb[0].mxu0
      %v683 = vadd.f32 0.0, %v682
      %v684 = vpop.f32.mrb[0].mxu0
      %v685 = vadd.f32 0.0, %v684
      %686 = vmatprep.mubr.f32.mxu0 0.0
      %687 = vmatmul.mubr.f32.gmra.mrb[0].mxu0 %v608
      %v688 = vpop.f32.mrb[0].mxu0
      %v689 = vadd.f32 0.0, %v688
      %v690 = vpop.f32.mrb[0].mxu0
      %v691 = vadd.f32 0.0, %v690
      %692 = vdwg.mxu0
      %v693 = vadd.f32 %v689, 1e-08
      %v694 = vadd.f32 %v691, 1e-08
      %v695 = vrcp.pop %v693
      %v696 = vrcp.pop %v694
      %v697 = vmul.f32 %v695, 9.0
      %v698 = vmul.f32 %v696, 9.0
      %v699 = vmax.f32 %v689, 0.0
      %v700 = vmax.f32 %v691, 0.0
      %v701 = vmin.f32 %v699, 1.0
      %v702 = vmin.f32 %v700, 1.0
      %v703 = vmul.f32 %v697, %v701
      %v704 = vmul.f32 %v698, %v702
      %v705 = vlaneseq
      %v706 = vshrl.u32 %v705, 7
      %v707 = vsub.s32 0, %v706
      %v708 = vrot.slane %v703, %v707
      %v709 = vlaneseq
      %v710 = vshrl.u32 %v709, 7
      %v711 = vsub.s32 0, %v710
      %v712 = vrot.slane %v704, %v711
      %v713 = vmul.f32 %v677, %v708
      %v714 = vmul.f32 %v679, %v712
      %v715 = vmul.f32 %v683, %v708
      %v716 = vmul.f32 %v685, %v712
      %v717 = vld [vmem:[%s3] sm:$0xff]
      %v718 = vld [vmem:[%s3 + $0x8] sm:$0xff]
      %720 = vset.pattern.permute.xlu0 0
      %721 = vperm.xlu0 %720, %v717
      %v722 = vpop.permute.xlu0 %721
      %725 = vset.pattern.permute.xlu0 0
      %726 = vperm.xlu0 %725, %v718
      %v727 = vpop.permute.xlu0 %726
      %v729 = vadd.f32 %v713, %v722
      %v730 = vadd.f32 %v714, %v722
      %v731 = vadd.f32 %v715, %v727
      %v732 = vadd.f32 %v716, %v727
      %v733 = vlaneseq
      %v734 = vshrl.u32 %v733, 7
      %v735 = vsub.s32 0, %v734
      %v736 = vrot.slane %v701, %v735
      %v737 = vlaneseq
      %v738 = vshrl.u32 %v737, 7
      %v739 = vsub.s32 0, %v738
      %v740 = vrot.slane %v702, %v739
      %v741 = vmul.f32 %v729, %v736
      %v742 = vmul.f32 %v730, %v740
      %v743 = vmul.f32 %v731, %v736
      %v744 = vmul.f32 %v732, %v740
      %s745 = sld [smem:[#allocation4]]
      %vm746 = vcmp.ge.f32.partialorder %v741, 0.0
      %vm747 = vcmp.ge.f32.partialorder %v742, 0.0
      %vm748 = vcmp.ge.f32.partialorder %v743, 0.0
      %vm749 = vcmp.ge.f32.partialorder %v744, 0.0
      %v750 = vstv %s745
      %v751 = vmul.f32 %v750, %v741
      %v752 = vmul.f32 %v750, %v742
      %v753 = vmul.f32 %v750, %v743
      %v754 = vmul.f32 %v750, %v744
      %v755 = vsel %vm746, %v741, %v751
      %v756 = vsel %vm747, %v742, %v752
      %v757 = vsel %vm748, %v743, %v753
      %v758 = vsel %vm749, %v744, %v754
      %759 = vst [vmem:[%s269] sm:$0xff] %v755
      %760 = vst [vmem:[%s269 + $0x8] sm:$0xff] %v756
      %761 = vst [vmem:[%s269 + $0x10] sm:$0xff] %v757
      %762 = vst [vmem:[%s269 + $0x18] sm:$0xff] %v758
      %763 = vst [vmem:[%s269 + $0x20] sm:$0x1] %v701
      %764 = vst [vmem:[%s269 + $0x28] sm:$0x1] %v702
      %p765 = scmp.lt.s32.totalorder %s18, 1
      %s766 = scalar_select %p765, %s18, 1
      %s767 = smul.addr %s766, 6
      %s768 = smul.addr %s767, 8
      %s769 = scalar_lea.vmem %s6, %s768
      // Predicated region
      $region45: #{_lambda_.1} parent=43 // pred_check
        %p770 = pneg %p172
      $region46: #{_lambda_.1} parent=43 // pred_check_branch
        %772 = sbr.rel (%p770) target = $region48
      $region47: #{_lambda_.1} parent=43 // pred_region
        _
      $region48: #{_lambda_.1} parent=43 // pred_fallthru
        _
    $region44: #{_lambda_.1} parent=5 // pred_fallthru
      _
    %p773 = scmp.le.s32.totalorder 2, %s13
    // Predicated region
    $region49: #{_lambda_.1} parent=5 // pred_check
      %p774 = pneg %p773
    $region50: #{_lambda_.1} parent=5 // pred_check_branch
      %776 = sbr.rel (%p774) target = $region52
    $region51: #{_lambda_.1} parent=5 // pred_region
      %s777 = ssub.s32 %s13, 2
      // Predicated region
      $region53: #{_lambda_.1} parent=51 // pred_check
        %p778 = pneg %p178
      $region54: #{_lambda_.1} parent=51 // pred_check_branch
        %780 = sbr.rel (%p778) target = $region56
      $region55: #{_lambda_.1} parent=51 // pred_region
        %p781 = scmp.lt.s32.totalorder %s19, 1
        %s782 = scalar_select %p781, %s19, 1
        %s783 = smul.addr %s782, 6
        %s784 = smul.addr %s783, 8
        %s785 = scalar_lea.vmem %s6, %s784
      $region56: #{_lambda_.1} parent=51 // pred_fallthru
        _
    $region52: #{_lambda_.1} parent=5 // pred_fallthru
      _
  $region6: #{_lambda_.1} parent=0 // loop_footer
    %s17 = sadd.s32 1, %s13
  $region7: #{_lambda_.1} parent=0 // loop_footer_branch
    %12 = sbr.rel target = $region3
  $region8: #{_lambda_.1} parent=0 // loop_exit
    _

</llo_original>
